<compile_context>
chip_gen: v5e
topology: v5e:2x2
jax: 0.10.0
libtpu: 0.0.40
codegen_flags: <defaults>
</compile_context>

<pallas_src>
import jax
import jax.numpy as jnp
from jax.experimental import pallas as pl
from jax.experimental.pallas import tpu as pltpu

EPS = 1e-5
_TARGET_BLOCK_BYTES = 2 * 1024 * 1024     # per-block footprint target
_VMEM_LIMIT_BYTES = 32 * 1024 * 1024      # safe on v5e/v6e/v7x


def _largest_divisor_leq(n, cap, multiple_of=1):
    best = None
    for d in range(1, n + 1):
        if n % d == 0 and d % multiple_of == 0 and d <= cap:
            best = d
    return best if best is not None else n


def _pick_tiles(N, C, HW, itemsize):
    """Choose (tile_n, tile_hw) dividing (N, HW) with lane-dense last dim."""
    if HW % 128 == 0:
        tile_hw = _largest_divisor_leq(HW, 2048, multiple_of=128)
    else:
        # Full last dim is always a legal block extent.
        # TODO(synk): for small / unaligned H*W, fuse (N*H*W) per channel for lane density.
        tile_hw = HW
    max_n = max(1, _TARGET_BLOCK_BYTES // max(1, C * tile_hw * itemsize))
    tile_n = _largest_divisor_leq(N, max_n)
    return tile_n, tile_hw


def _stats_kernel(x_ref, sum_ref, sq_ref):
    # x_ref: (tile_n, C, tile_hw) in input dtype
    # sum_ref / sq_ref: (C, 1) f32, resident across the reduction grid axes
    ni = pl.program_id(1)
    hj = pl.program_id(2)

    @pl.when(jnp.logical_and(ni == 0, hj == 0))
    def _():
        sum_ref[...] = jnp.zeros_like(sum_ref)
        sq_ref[...] = jnp.zeros_like(sq_ref)

    x = x_ref[...].astype(jnp.float32)
    sum_ref[...] += jnp.sum(x, axis=(0, 2))[:, None]
    sq_ref[...] += jnp.sum(x * x, axis=(0, 2))[:, None]


def _apply_kernel(x_ref, scale_ref, shift_ref, o_ref):
    # x_ref / o_ref: (tile_n, C, tile_hw); scale_ref / shift_ref: (C, 1) f32
    x = x_ref[...].astype(jnp.float32)
    y = x * scale_ref[...][None] + shift_ref[...][None]
    o_ref[...] = y.astype(o_ref.dtype)


def esm_batchnorm2d(x, gammas, betas, num_member):
    """x: (B, C, H, W) NCHW; gammas/betas: (num_member, C)."""
    B, C, H, W = x.shape
    assert B % num_member == 0, "batch must be divisible by num_member"
    M = num_member
    N = B // M
    HW = H * W

    xm = x.reshape(M, N, C, HW)                      # free reshape, NCHW-contiguous
    itemsize = jnp.dtype(x.dtype).itemsize
    tile_n, tile_hw = _pick_tiles(N, C, HW, itemsize)
    grid = (M, N // tile_n, HW // tile_hw)
    numel = B * C * HW

    x_spec = pl.BlockSpec((None, tile_n, C, tile_hw),
                          lambda m, ni, hj: (m, ni, 0, hj))
    stat_spec = pl.BlockSpec((None, C, 1), lambda m, ni, hj: (m, 0, 0))

    # ---- pass 1: per-(member, channel) sum and sum-of-squares ----
    sums, sqs = pl.pallas_call(
        _stats_kernel,
        out_shape=(jax.ShapeDtypeStruct((M, C, 1), jnp.float32),
                   jax.ShapeDtypeStruct((M, C, 1), jnp.float32)),
        grid_spec=pltpu.PrefetchScalarGridSpec(
            num_scalar_prefetch=0,
            grid=grid,
            in_specs=[x_spec],
            out_specs=(stat_spec, stat_spec)),
        compiler_params=pltpu.CompilerParams(
            dimension_semantics=("parallel", "arbitrary", "arbitrary"),
            vmem_limit_bytes=_VMEM_LIMIT_BYTES),
        cost_estimate=pl.CostEstimate(
            flops=3 * numel, transcendentals=0,
            bytes_accessed=numel * itemsize + 2 * M * C * 4),
    )(xm)

    # ---- tiny per-(member, channel) math in plain XLA: fold BN into scale/shift ----
    count = jnp.float32(N * HW)
    mean = sums[..., 0] / count                       # (M, C)
    var = sqs[..., 0] / count - mean * mean           # biased variance
    var = jnp.maximum(var, 0.0)                       # guard tiny negative (cancellation)
    inv = jax.lax.rsqrt(var + EPS)
    scale = gammas.astype(jnp.float32) * inv          # (M, C)
    shift = betas.astype(jnp.float32) - mean * scale
    scale = scale[:, :, None]                         # (M, C, 1): C on sublane axis
    shift = shift[:, :, None]

    # ---- pass 2: y = x * scale + shift, streamed ----
    out = pl.pallas_call(
        _apply_kernel,
        out_shape=jax.ShapeDtypeStruct((M, N, C, HW), x.dtype),
        grid_spec=pltpu.PrefetchScalarGridSpec(
            num_scalar_prefetch=0,
            grid=grid,
            in_specs=[x_spec, stat_spec, stat_spec],
            out_specs=x_spec),
        compiler_params=pltpu.CompilerParams(
            dimension_semantics=("parallel", "parallel", "parallel"),
            vmem_limit_bytes=_VMEM_LIMIT_BYTES),
        cost_estimate=pl.CostEstimate(
            flops=2 * numel, transcendentals=0,
            bytes_accessed=2 * numel * itemsize + 2 * M * C * 4),
    )(xm, scale, shift)

    return out.reshape(B, C, H, W)


def esm_batchnorm2d_ref(x, gammas, betas, num_member):
    """Pure-JAX reference mirroring the PyTorch forward (training-mode BN)."""
    B, C, H, W = x.shape
    N = B // num_member
    outs = []
    for i in range(num_member):
        xi = x[i * N:(i + 1) * N].astype(jnp.float32)
        mean = xi.mean(axis=(0, 2, 3), keepdims=True)
        var = ((xi - mean) ** 2).mean(axis=(0, 2, 3), keepdims=True)
        yi = (xi - mean) / jnp.sqrt(var + EPS)
        yi = yi * gammas[i].reshape(1, C, 1, 1) + betas[i].reshape(1, C, 1, 1)
        outs.append(yi.astype(x.dtype))
    return jnp.concatenate(outs, axis=0)


if __name__ == "__main__":
    num_member = 2
    B, C, H, W = 4, 8, 16, 16   # B divisible by num_member

    key = jax.random.PRNGKey(0)
    kx, kg, kb = jax.random.split(key, 3)

    x = jax.random.normal(kx, (B, C, H, W), dtype=jnp.float32)
    # PyTorch default init is gamma=1, beta=0; perturb deterministically so the
    # affine path is exercised.
    gammas = 1.0 + 0.1 * jax.random.normal(kg, (num_member, C), dtype=jnp.float32)
    betas = 0.1 * jax.random.normal(kb, (num_member, C), dtype=jnp.float32)

    y = esm_batchnorm2d(x, gammas, betas, num_member)
    y = jax.block_until_ready(y)

    y_ref = esm_batchnorm2d_ref(x, gammas, betas, num_member)
    assert y.shape == (B, C, H, W)
    assert jnp.allclose(y, y_ref, rtol=1e-4, atol=1e-4), "mismatch vs reference"

    print("KERNEL_OK")
</pallas_src>

<mosaic_0001>
module attributes {stable_mosaic.version = 11 : i64} {
  func.func @_stats_kernel(%arg0: i32, %arg1: i32, %arg2: i32, %arg3: memref<1x2x8x256xf32, #tpu.memory_space<vmem>>, %arg4: memref<1x8x1xf32, #tpu.memory_space<vmem>>, %arg5: memref<1x8x1xf32, #tpu.memory_space<vmem>>) attributes {dimension_semantics = [#tpu.dimension_semantics<parallel>, #tpu.dimension_semantics<arbitrary>, #tpu.dimension_semantics<arbitrary>], iteration_bounds = array<i64: 2, 1, 1>, scalar_prefetch = 0 : i64, scratch_operands = 0 : i64, tpu.core_type = #tpu.core_type<tc>, window_params = [{transform_indices = @transform_0, window_bounds = array<i64: 1, 2, 8, 256>}, {transform_indices = @transform_1, window_bounds = array<i64: 1, 8, 1>}, {transform_indices = @transform_2, window_bounds = array<i64: 1, 8, 1>}]} {
    %c0_i32 = arith.constant 0 : i32
    %0 = arith.cmpi eq, %arg1, %c0_i32 : i32
    %c0_i32_0 = arith.constant 0 : i32
    %1 = arith.cmpi eq, %arg2, %c0_i32_0 : i32
    %2 = arith.andi %0, %1 : i1
    %3 = arith.extui %2 : i1 to i32
    %c0_i32_1 = arith.constant 0 : i32
    %4 = arith.cmpi ne, %3, %c0_i32_1 : i32
    scf.if %4 {
      %cst_18 = arith.constant 0.000000e+00 : f32
      %24 = vector.broadcast %cst_18 : f32 to vector<8x1xf32>
      %c0_19 = arith.constant 0 : index
      %c0_20 = arith.constant 0 : index
      %c0_21 = arith.constant 0 : index
      %25 = vector.load %arg4[%c0_19, %c0_20, %c0_21] : memref<1x8x1xf32, #tpu.memory_space<vmem>>, vector<1x8x1xf32>
      %26 = vector.shape_cast %25 : vector<1x8x1xf32> to vector<8x1xf32>
      %27 = vector.shape_cast %24 : vector<8x1xf32> to vector<1x8x1xf32>
      tpu.vector_store %arg4[%c0_19, %c0_20, %c0_21], %27 {strides = array<i32>} : memref<1x8x1xf32, #tpu.memory_space<vmem>>, vector<1x8x1xf32>,
      %cst_22 = arith.constant 0.000000e+00 : f32
      %28 = vector.broadcast %cst_22 : f32 to vector<8x1xf32>
      %c0_23 = arith.constant 0 : index
      %c0_24 = arith.constant 0 : index
      %c0_25 = arith.constant 0 : index
      %29 = vector.load %arg5[%c0_23, %c0_24, %c0_25] : memref<1x8x1xf32, #tpu.memory_space<vmem>>, vector<1x8x1xf32>
      %30 = vector.shape_cast %29 : vector<1x8x1xf32> to vector<8x1xf32>
      %31 = vector.shape_cast %28 : vector<8x1xf32> to vector<1x8x1xf32>
      tpu.vector_store %arg5[%c0_23, %c0_24, %c0_25], %31 {strides = array<i32>} : memref<1x8x1xf32, #tpu.memory_space<vmem>>, vector<1x8x1xf32>,
    } else {
    }
    %c0 = arith.constant 0 : index
    %c0_2 = arith.constant 0 : index
    %c0_3 = arith.constant 0 : index
    %c0_4 = arith.constant 0 : index
    %5 = vector.load %arg3[%c0, %c0_2, %c0_3, %c0_4] : memref<1x2x8x256xf32, #tpu.memory_space<vmem>>, vector<1x2x8x256xf32>
    %6 = vector.shape_cast %5 : vector<1x2x8x256xf32> to vector<2x8x256xf32>
    %c0_5 = arith.constant 0 : index
    %c0_6 = arith.constant 0 : index
    %c0_7 = arith.constant 0 : index
    %7 = vector.load %arg4[%c0_5, %c0_6, %c0_7] : memref<1x8x1xf32, #tpu.memory_space<vmem>>, vector<1x8x1xf32>
    %8 = vector.shape_cast %7 : vector<1x8x1xf32> to vector<8x1xf32>
    %cst = arith.constant dense<0.000000e+00> : vector<8xf32>
    %9 = vector.multi_reduction <add>, %6, %cst [0, 2] : vector<2x8x256xf32> to vector<8xf32>
    %10 = vector.shape_cast %9 : vector<8xf32> to vector<8x1xf32>
    %11 = arith.addf %8, %10 : vector<8x1xf32>
    %c0_8 = arith.constant 0 : index
    %c0_9 = arith.constant 0 : index
    %c0_10 = arith.constant 0 : index
    %12 = vector.load %arg4[%c0_8, %c0_9, %c0_10] : memref<1x8x1xf32, #tpu.memory_space<vmem>>, vector<1x8x1xf32>
    %13 = vector.shape_cast %12 : vector<1x8x1xf32> to vector<8x1xf32>
    %14 = vector.shape_cast %11 : vector<8x1xf32> to vector<1x8x1xf32>
    tpu.vector_store %arg4[%c0_8, %c0_9, %c0_10], %14 {strides = array<i32>} : memref<1x8x1xf32, #tpu.memory_space<vmem>>, vector<1x8x1xf32>,
    %c0_11 = arith.constant 0 : index
    %c0_12 = arith.constant 0 : index
    %c0_13 = arith.constant 0 : index
    %15 = vector.load %arg5[%c0_11, %c0_12, %c0_13] : memref<1x8x1xf32, #tpu.memory_space<vmem>>, vector<1x8x1xf32>
    %16 = vector.shape_cast %15 : vector<1x8x1xf32> to vector<8x1xf32>
    %17 = arith.mulf %6, %6 : vector<2x8x256xf32>
    %cst_14 = arith.constant dense<0.000000e+00> : vector<8xf32>
    %18 = vector.multi_reduction <add>, %17, %cst_14 [0, 2] : vector<2x8x256xf32> to vector<8xf32>
    %19 = vector.shape_cast %18 : vector<8xf32> to vector<8x1xf32>
    %20 = arith.addf %16, %19 : vector<8x1xf32>
    %c0_15 = arith.constant 0 : index
    %c0_16 = arith.constant 0 : index
    %c0_17 = arith.constant 0 : index
    %21 = vector.load %arg5[%c0_15, %c0_16, %c0_17] : memref<1x8x1xf32, #tpu.memory_space<vmem>>, vector<1x8x1xf32>
    %22 = vector.shape_cast %21 : vector<1x8x1xf32> to vector<8x1xf32>
    %23 = vector.shape_cast %20 : vector<8x1xf32> to vector<1x8x1xf32>
    tpu.vector_store %arg5[%c0_15, %c0_16, %c0_17], %23 {strides = array<i32>} : memref<1x8x1xf32, #tpu.memory_space<vmem>>, vector<1x8x1xf32>,
    return
  }
  func.func @transform_0(%arg0: i32, %arg1: i32, %arg2: i32) -> (i32, i32, i32, i32) {
    %c0_i32 = arith.constant 0 : i32
    %c0_i32_0 = arith.constant 0 : i32
    return %arg0, %arg1, %c0_i32, %arg2 : i32, i32, i32, i32
  }
  func.func @transform_1(%arg0: i32, %arg1: i32, %arg2: i32) -> (i32, i32, i32) {
    %c0_i32 = arith.constant 0 : i32
    %c0_i32_0 = arith.constant 0 : i32
    %c0_i32_1 = arith.constant 0 : i32
    return %arg0, %c0_i32, %c0_i32_0 : i32, i32, i32
  }
  func.func @transform_2(%arg0: i32, %arg1: i32, %arg2: i32) -> (i32, i32, i32) {
    %c0_i32 = arith.constant 0 : i32
    %c0_i32_0 = arith.constant 0 : i32
    %c0_i32_1 = arith.constant 0 : i32
    return %arg0, %c0_i32, %c0_i32_0 : i32, i32, i32
  }
}

</mosaic_0001>

<llo_original>
// kernel: tpu_custom_call.1
$region0: #{tpu_custom_call.1}
  #allocation0 [shape = 'u32[]', space=smem, size = 0x4, offset = 0x4, fixed_abs, tag = 'smem constant byte address 0x4 - core index']
  #allocation1 [shape = 'u32[72,128]{1,0:T(1,128)}', space=vmem, size = 0x9000, scoped, tag = 'internal scratch']
  %s0 = inlined_call_operand.hbm [shape: f32[2,2,8,256], index: 0, kind: input, shape index: {}]
  %s1 = inlined_call_operand.vmem [shape: f32[2,8,1], index: 1, kind: output, shape index: {0}]
  %s2 = inlined_call_operand.vmem [shape: f32[2,8,1], index: 2, kind: output, shape index: {1}]
  %3 = xla_tuple %s1, %s2
  %s4 = sld [smem:[#allocation0]]
  $region53: #{tpu_custom_call.1} parent=0
    _
  %s6 = ssub.s32 1, %s4
  %s7 = scalar_select 0, %s6, %s4
  $region1: #{tpu_custom_call.1} parent=0
    #allocation2 [shape = 'u8[32768]{0}', space=vmem, size = 0x8000, scoped, tag = 'input window, operand 0']
    #allocation3 [shape = 's32[2]{0}', space=sflag, size = 0x8, scoped, tag = 'scoped memory for tpu_custom_call.1']
    %8 = vsyncpa [#allocation3], 0
    %s9 = scalar_lea.sflag [#allocation3], 1
    %10 = vsyncpa %s9, 0
    loop: start=0, step=1, limit=4
    $region2: #{tpu_custom_call.1} parent=1 // loop_pre_header
      _
    $region3: #{tpu_custom_call.1} parent=1 // loop_header
      %s12 = sphi 0, %s16
      %p13 = scmp.ge.s32.totalorder %s12, 4
      %s19 = sphi 0, %s38
      %s20 = sphi 0, %s34
      %s21 = sphi 0, %s30
      %s22 = sphi 0, %s19
      %s23 = sphi 0, %s20
      %s24 = sphi 0, %s21
      %s25 = sphi 0, %s22
      %s26 = sphi 0, %s23
      %s27 = sphi 0, %s24
      %s45 = sphi 0, %s47
      %s48 = sphi 0, %s45
      %s49 = sphi 0, %s48
      %s65 = sphi 0, %s49
      %s71 = sphi 0, %s73
      %s74 = sphi 0, %s71
      %s75 = sphi 0, %s74
      %s91 = sphi 0, %s75
      %s97 = sphi 0, %s99
      %s100 = sphi 0, %s97
      %s101 = sphi 0, %s100
      %s117 = sphi 0, %s101
    $region4: #{tpu_custom_call.1} parent=1 // loop_header_branch
      %15 = sbr.rel (%p13) target = $region8
    $region5: #{tpu_custom_call.1} parent=1 // loop_body
      %s17 = ssub.s32 %s12, 1
      %s18 = ssub.s32 %s12, 2
      %s28 = sadd.s32 1, %s21
      %p29 = scmp.ge.s32.totalorder %s28, 1
      %s30 = scalar_select %p29, 0, %s28
      %s31 = sadd.s32 1, %s20
      %s32 = scalar_select %p29, %s31, %s20
      %p33 = scmp.ge.s32.totalorder %s32, 1
      %s34 = scalar_select %p33, 0, %s32
      %s35 = sadd.s32 1, %s19
      %s36 = scalar_select %p33, %s35, %s19
      %p37 = scmp.ge.s32.totalorder %s36, 2
      %s38 = scalar_select %p37, 0, %s36
      %s39 = ssub.s32 %s19, %s38
      %s40 = ssub.s32 %s20, %s34
      %s41 = sor.u32 %s39, %s40
      %s42 = ssub.s32 %s21, %s30
      %s43 = sor.u32 %s41, %s42
      %p44 = scmp.eq.s32.totalorder %s43, 0
      %s46 = sadd.s32 %s45, 1
      %s47 = scalar_select %p44, %s45, %s46
      %p50 = pneg %p44
      %p51 = scmp.eq.s32.totalorder %s12, 1
      %p52 = por %p50, %p51
      %p53 = scmp.ne.s32.totalorder %s45, %s48
      %p54 = scmp.eq.s32.totalorder %s12, 0
      %p55 = por %p53, %p54
      %p56 = scmp.ne.s32.totalorder %s45, %s48
      %p57 = scmp.eq.s32.totalorder %s17, 1
      %p58 = por %p56, %p57
      %p59 = scmp.ne.s32.totalorder %s48, %s49
      %p60 = scmp.eq.s32.totalorder %s17, 0
      %p61 = por %p59, %p60
      %p62 = scmp.ne.s32.totalorder %s48, %s49
      %p63 = scmp.eq.s32.totalorder %s18, 1
      %p64 = por %p62, %p63
      %p66 = scmp.ne.s32.totalorder %s49, %s65
      %p67 = scmp.eq.s32.totalorder %s18, 0
      %p68 = por %p66, %p67
      %s69 = ssub.s32 %s19, %s38
      %p70 = scmp.eq.s32.totalorder %s69, 0
      %s72 = sadd.s32 %s71, 1
      %s73 = scalar_select %p70, %s71, %s72
      %p76 = pneg %p70
      %p77 = scmp.eq.s32.totalorder %s12, 1
      %p78 = por %p76, %p77
      %p79 = scmp.ne.s32.totalorder %s71, %s74
      %p80 = scmp.eq.s32.totalorder %s12, 0
      %p81 = por %p79, %p80
      %p82 = scmp.ne.s32.totalorder %s71, %s74
      %p83 = scmp.eq.s32.totalorder %s17, 1
      %p84 = por %p82, %p83
      %p85 = scmp.ne.s32.totalorder %s74, %s75
      %p86 = scmp.eq.s32.totalorder %s17, 0
      %p87 = por %p85, %p86
      %p88 = scmp.ne.s32.totalorder %s74, %s75
      %p89 = scmp.eq.s32.totalorder %s18, 1
      %p90 = por %p88, %p89
      %p92 = scmp.ne.s32.totalorder %s75, %s91
      %p93 = scmp.eq.s32.totalorder %s18, 0
      %p94 = por %p92, %p93
      %s95 = ssub.s32 %s19, %s38
      %p96 = scmp.eq.s32.totalorder %s95, 0
      %s98 = sadd.s32 %s97, 1
      %s99 = scalar_select %p96, %s97, %s98
      %p102 = pneg %p96
      %p103 = scmp.eq.s32.totalorder %s12, 1
      %p104 = por %p102, %p103
      %p105 = scmp.ne.s32.totalorder %s97, %s100
      %p106 = scmp.eq.s32.totalorder %s12, 0
      %p107 = por %p105, %p106
      %p108 = scmp.ne.s32.totalorder %s97, %s100
      %p109 = scmp.eq.s32.totalorder %s17, 1
      %p110 = por %p108, %p109
      %p111 = scmp.ne.s32.totalorder %s100, %s101
      %p112 = scmp.eq.s32.totalorder %s17, 0
      %p113 = por %p111, %p112
      %p114 = scmp.ne.s32.totalorder %s100, %s101
      %p115 = scmp.eq.s32.totalorder %s18, 1
      %p116 = por %p114, %p115
      %p118 = scmp.ne.s32.totalorder %s101, %s117
      %p119 = scmp.eq.s32.totalorder %s18, 0
      %p120 = por %p118, %p119
      %p121 = scmp.le.s32.totalorder 1, %s12
      %p122 = scmp.lt.s32.totalorder %s12, 3
      %p123 = pnand %p121, %p122
      %p124 = pneg %p123
      // Predicated region
      $region9: #{tpu_custom_call.1} parent=5 // pred_check
        _
      $region10: #{tpu_custom_call.1} parent=5 // pred_check_branch
        %126 = sbr.rel (%p123) target = $region12
      $region11: #{tpu_custom_call.1} parent=5 // pred_region
        %s127 = ssub.s32 %s12, 1
      $region12: #{tpu_custom_call.1} parent=5 // pred_fallthru
        _
      %p128 = scmp.lt.s32.totalorder %s12, 2
      // Predicated region
      $region13: #{tpu_custom_call.1} parent=5 // pred_check
        %p129 = pneg %p128
      $region14: #{tpu_custom_call.1} parent=5 // pred_check_branch
        %131 = sbr.rel (%p129) target = $region16
      $region15: #{tpu_custom_call.1} parent=5 // pred_region
        // Predicated region
        $region17: #{tpu_custom_call.1} parent=15 // pred_check
          %p132 = pneg %p55
        $region18: #{tpu_custom_call.1} parent=15 // pred_check_branch
          %134 = sbr.rel (%p132) target = $region20
        $region19: #{tpu_custom_call.1} parent=15 // pred_region
          %s135 = sand.u32 %s45, 1
          %s136 = scalar_lea.sflag [#allocation3], %s135
          %s137 = sand.u32 %s45, 1
          %s138 = smul.addr %s137, 32
          %s139 = scalar_lea.vmem [#allocation2], %s138
          %s140 = smul.u32 2, %s20
          %s141 = smul.u32 2, %s21
          %143 = vsyncadd %s136, 0
          %s144 = smul.addr %s140, 2
          %s145 = sadd.s32 %s141, %s144
          %s146 = smul.addr %s19, 4
          %s147 = sadd.s32 %s145, %s146
          %s148 = smul.addr %s147, 8
          %s149 = scalar_lea.hbm %s0, %s148
          %s150 = sshll.u32 %s149, 4
          %s151 = int_to_ptr.hbm [resolvable:$true] %s150
          %s152 = sshll.u32 %s139, 4
          %s153 = int_to_ptr.vmem [resolvable:$true] %s152
          %158 = dma.hbm_to_vmem [thread:$0]  %s151, 512, %s153, %s136, 256, 256, 16
        $region20: #{tpu_custom_call.1} parent=15 // pred_fallthru
          _
      $region16: #{tpu_custom_call.1} parent=5 // pred_fallthru
        _
      %p159 = scmp.le.s32.totalorder 1, %s12
      %p160 = scmp.lt.s32.totalorder %s12, 3
      %p161 = pnand %p159, %p160
      %p162 = pneg %p161
      // Predicated region
      $region21: #{tpu_custom_call.1} parent=5 // pred_check
        _
      $region22: #{tpu_custom_call.1} parent=5 // pred_check_branch
        %164 = sbr.rel (%p161) target = $region24
      $region23: #{tpu_custom_call.1} parent=5 // pred_region
        %s165 = ssub.s32 %s12, 1
        %s166 = sand.u32 %s48, 1
        %s167 = scalar_lea.sflag [#allocation3], %s166
        %s168 = sand.u32 %s48, 1
        %s169 = smul.addr %s168, 32
        %s170 = scalar_lea.vmem [#allocation2], %s169
        // Predicated region
        $region25: #{tpu_custom_call.1} parent=23 // pred_check
          %p171 = pneg %p61
        $region26: #{tpu_custom_call.1} parent=23 // pred_check_branch
          %173 = sbr.rel (%p171) target = $region28
        $region27: #{tpu_custom_call.1} parent=23 // pred_region
          %175 = dma.done %s167, 512
        $region28: #{tpu_custom_call.1} parent=23 // pred_fallthru
          _
        %s176 = sand.u32 %s48, 1
        %s177 = scalar_lea.sflag [#allocation3], %s176
        %s178 = sand.u32 %s48, 1
        %s179 = smul.addr %s178, 32
        %s180 = scalar_lea.vmem [#allocation2], %s179
        %p181 = pneg %p61
        %p182 = pneg %p58
        %p183 = pneg %p87
        %p184 = pneg %p84
        %p185 = scmp.lt.s32.totalorder %s22, 1
        %s186 = scalar_select %p185, %s22, 1
        %s187 = smul.addr %s186, 8
        %s188 = scalar_lea.vmem %s1, %s187
        %p189 = pneg %p113
        %p190 = pneg %p110
        %p191 = scmp.lt.s32.totalorder %s22, 1
        %s192 = scalar_select %p191, %s22, 1
        %s193 = smul.addr %s192, 8
        %s194 = scalar_lea.vmem %s2, %s193
        %s195 = smul.u32 2, %s23
        %s196 = smul.u32 2, %s24
        %p197 = scmp.lt.s32.totalorder %s22, 1
        %s198 = scalar_select %p197, %s22, 1
        %s199 = smul.addr %s198, 8
        %s200 = scalar_lea.vmem %s1, %s199
        %p201 = scmp.lt.s32.totalorder %s22, 1
        %s202 = scalar_select %p201, %s22, 1
        %s203 = smul.addr %s202, 8
        %s204 = scalar_lea.vmem %s2, %s203
        %p205 = scmp.eq.s32.totalorder %s23, 0
        %p206 = scmp.eq.s32.totalorder %s24, 0
        %p207 = pnand %p205, %p206
        %p208 = pneg %p207
        // Predicated region
        $region29: #{tpu_custom_call.1} parent=23 // pred_check
          _
        $region30: #{tpu_custom_call.1} parent=23 // pred_check_branch
          %210 = sbr.rel (%p207) target = $region32
        $region31: #{tpu_custom_call.1} parent=23 // pred_region
          %vm211 = vcmask 7168
          %212 = vst.msk [vmem:[%s200] sm:$0xff] %vm211, 0.0
          %213 = vst.msk [vmem:[%s204] sm:$0xff] %vm211, 0.0
        $region32: #{tpu_custom_call.1} parent=23 // pred_fallthru
          _
        %v214 = vld [vmem:[%s170] sm:$0xff]
        %v215 = vld [vmem:[%s170 + $0x8] sm:$0xff]
        %v216 = vld [vmem:[%s170 + $0x10] sm:$0xff]
        %v217 = vld [vmem:[%s170 + $0x18] sm:$0xff]
        %v218 = vld [vmem:[%s200] sm:$0xff]
        %v219 = vadd.f32 %v214, %v215
        %v220 = vadd.f32 %v219, %v216
        %v221 = vadd.f32 %v220, %v217
        %222 = vadd.xlane.f32.xlu0 %v221
        %v223 = vpop.xlane.xlu0 %222
        %v224 = vadd.f32 %v218, %v223
        %vm225 = vcmask 7168
        %226 = vst.msk [vmem:[%s200] sm:$0xff] %vm225, %v224
        %v227 = vld [vmem:[%s204] sm:$0xff]
        %v228 = vmul.f32 %v214, %v214
        %v229 = vmul.f32 %v215, %v215
        %v230 = vmul.f32 %v216, %v216
        %v231 = vmul.f32 %v217, %v217
        %v232 = vadd.f32 %v228, %v229
        %v233 = vadd.f32 %v232, %v230
        %v234 = vadd.f32 %v233, %v231
        %235 = vadd.xlane.f32.xlu0 %v234
        %v236 = vpop.xlane.xlu0 %235
        %v237 = vadd.f32 %v227, %v236
        %238 = vst.msk [vmem:[%s204] sm:$0xff] %vm225, %v237
        %p239 = scmp.lt.s32.totalorder %s22, 1
        %s240 = scalar_select %p239, %s22, 1
        %s241 = smul.addr %s240, 8
        %s242 = scalar_lea.vmem %s1, %s241
        %p243 = scmp.lt.s32.totalorder %s22, 1
        %s244 = scalar_select %p243, %s22, 1
        %s245 = smul.addr %s244, 8
        %s246 = scalar_lea.vmem %s2, %s245
        // Predicated region
        $region33: #{tpu_custom_call.1} parent=23 // pred_check
          %p247 = pneg %p84
        $region34: #{tpu_custom_call.1} parent=23 // pred_check_branch
          %249 = sbr.rel (%p247) target = $region36
        $region35: #{tpu_custom_call.1} parent=23 // pred_region
          _
        $region36: #{tpu_custom_call.1} parent=23 // pred_fallthru
          _
        // Predicated region
        $region37: #{tpu_custom_call.1} parent=23 // pred_check
          %p250 = pneg %p110
        $region38: #{tpu_custom_call.1} parent=23 // pred_check_branch
          %252 = sbr.rel (%p250) target = $region40
        $region39: #{tpu_custom_call.1} parent=23 // pred_region
          _
        $region40: #{tpu_custom_call.1} parent=23 // pred_fallthru
          _
      $region24: #{tpu_custom_call.1} parent=5 // pred_fallthru
        _
      %p253 = scmp.le.s32.totalorder 2, %s12
      // Predicated region
      $region41: #{tpu_custom_call.1} parent=5 // pred_check
        %p254 = pneg %p253
      $region42: #{tpu_custom_call.1} parent=5 // pred_check_branch
        %256 = sbr.rel (%p254) target = $region44
      $region43: #{tpu_custom_call.1} parent=5 // pred_region
        %s257 = ssub.s32 %s12, 2
        // Predicated region
        $region45: #{tpu_custom_call.1} parent=43 // pred_check
          %p258 = pneg %p90
        $region46: #{tpu_custom_call.1} parent=43 // pred_check_branch
          %260 = sbr.rel (%p258) target = $region48
        $region47: #{tpu_custom_call.1} parent=43 // pred_region
          %p261 = scmp.lt.s32.totalorder %s25, 1
          %s262 = scalar_select %p261, %s25, 1
          %s263 = smul.addr %s262, 8
          %s264 = scalar_lea.vmem %s1, %s263
        $region48: #{tpu_custom_call.1} parent=43 // pred_fallthru
          _
        // Predicated region
        $region49: #{tpu_custom_call.1} parent=43 // pred_check
          %p265 = pneg %p116
        $region50: #{tpu_custom_call.1} parent=43 // pred_check_branch
          %267 = sbr.rel (%p265) target = $region52
        $region51: #{tpu_custom_call.1} parent=43 // pred_region
          %p268 = scmp.lt.s32.totalorder %s25, 1
          %s269 = scalar_select %p268, %s25, 1
          %s270 = smul.addr %s269, 8
          %s271 = scalar_lea.vmem %s2, %s270
        $region52: #{tpu_custom_call.1} parent=43 // pred_fallthru
          _
      $region44: #{tpu_custom_call.1} parent=5 // pred_fallthru
        _
    $region6: #{tpu_custom_call.1} parent=1 // loop_footer
      %s16 = sadd.s32 1, %s12
    $region7: #{tpu_custom_call.1} parent=1 // loop_footer_branch
      %11 = sbr.rel target = $region3
    $region8: #{tpu_custom_call.1} parent=1 // loop_exit
      _
    %272 = vsyncpa [#allocation3], 1
    %s273 = scalar_lea.sflag [#allocation3], 1
    %274 = vsyncpa %s273, 1

</llo_original>
